<compile_context>
chip_gen: v5e
topology: v5e:2x2
jax: 0.10.0
libtpu: 0.0.40
codegen_flags: <defaults>
</compile_context>

<pallas_src>
import jax
import jax.numpy as jnp
from jax.experimental import pallas as pl
from jax.experimental.pallas import tpu as pltpu

_LANES = 128
_TILE_BYTES_TARGET = 4 * 1024 * 1024   # 1-4 MiB tiles = measured HBM-roofline sweet spot
_VMEM_LIMIT_BYTES = 32 * 1024 * 1024   # safe on v5e/v6e/v7x (v7x physical VMEM = 64 MiB)


def _sublane_multiple(dtype) -> int:
    itemsize = jnp.dtype(dtype).itemsize
    if itemsize >= 4:
        return 8
    if itemsize == 2:
        return 16
    return 32


def _bias_add_kernel(x_ref, b_ref, o_ref):
    # x_ref: (TB, TW) tile in VMEM, b_ref: (1, TW) resident bias row.
    o_ref[...] = x_ref[...] + b_ref[...]


def _pick_block_rows(n_rows, row_bytes, sub, extra_resident_bytes):
    """Largest row-tile keeping 2x(in)+2x(out) double-buffered tiles in VMEM."""
    per_buf_budget = max(row_bytes, (_VMEM_LIMIT_BYTES - extra_resident_bytes) // 4)
    tile_bytes = min(_TILE_BYTES_TARGET, per_buf_budget)
    block_rows = max(sub, (tile_bytes // row_bytes) // sub * sub)
    if n_rows <= block_rows:
        return n_rows  # full-extent block: always a legal block shape
    return block_rows


def _call(x2, b2, block_rows, tile_w, out_dtype):
    rows, width = x2.shape
    grid = (pl.cdiv(rows, block_rows), pl.cdiv(width, tile_w))
    itemsize = jnp.dtype(out_dtype).itemsize
    cost = pl.CostEstimate(
        flops=rows * width,
        transcendentals=0,
        bytes_accessed=2 * rows * width * itemsize + width * itemsize,
    )
    return pl.pallas_call(
        _bias_add_kernel,
        out_shape=jax.ShapeDtypeStruct((rows, width), out_dtype),
        grid_spec=pl.GridSpec(
            grid=grid,
            in_specs=[
                pl.BlockSpec((block_rows, tile_w), lambda i, j: (i, j)),
                # Bias block index is constant along the row axis -> VMEM resident.
                pl.BlockSpec((1, tile_w), lambda i, j: (0, j)),
            ],
            out_specs=pl.BlockSpec((block_rows, tile_w), lambda i, j: (i, j)),
        ),
        compiler_params=pltpu.CompilerParams(
            # TODO(synk): on v7x verify the row axis really shards across both
            # TensorCores; if the trace shows one TC doing all work, move to a
            # leading pltpu.CORE_PARALLEL axis instead of the string semantics.
            dimension_semantics=("parallel", "parallel"),
            vmem_limit_bytes=_VMEM_LIMIT_BYTES,
        ),
        cost_estimate=cost,
    )(x2, b2)


def bias_model_forward(x, bias):
    """BiasModel.forward: x (..., num_classes) + bias (num_classes,)."""
    orig_shape = x.shape
    C = orig_shape[-1]
    assert bias.shape == (C,), "bias must have shape (num_classes,)"

    # torch promotion semantics: bf16/f16 x + f32 bias -> f32 result.
    out_dtype = jnp.promote_types(x.dtype, bias.dtype)
    xw = x.astype(out_dtype).reshape(-1, C)
    bw = bias.astype(out_dtype)
    B = xw.shape[0]
    sub = _sublane_multiple(out_dtype)
    itemsize = jnp.dtype(out_dtype).itemsize

    if _LANES % C == 0:
        # --- lane-dense repack (small classifier heads where C | 128) --------
        # Flatten, pad tail to a multiple of 128, view as (rows, 128): every
        # load/store and DMA beat uses all 128 lanes; bias becomes a single
        # resident 128-lane row (tiled 128/C times).
        total = B * C
        rows = pl.cdiv(total, _LANES)
        pad = rows * _LANES - total
        flat = xw.reshape(-1)
        if pad:
            flat = jnp.pad(flat, (0, pad))
        x2 = flat.reshape(rows, _LANES)
        b2 = jnp.tile(bw, _LANES // C).reshape(1, _LANES)
        row_bytes = _LANES * itemsize
        block_rows = _pick_block_rows(
            rows, row_bytes, sub, extra_resident_bytes=2 * _LANES * itemsize
        )
        out2 = _call(x2, b2, block_rows, _LANES, out_dtype)
        return out2.reshape(-1)[:total].reshape(orig_shape)

    # --- general path: pad C up to a lane multiple, 2-D (rows x lanes) grid ---
    # Keeps 128-lane unmasked stores for any C (vocab-sized or awkward widths
    # like C=10); the zero-pad columns are sliced away afterwards.
    C_pad = pl.cdiv(C, _LANES) * _LANES
    x2 = jnp.pad(xw, ((0, 0), (0, C_pad - C)))
    b2 = jnp.pad(bw, (0, C_pad - C)).reshape(1, C_pad)
    tile_w = min(C_pad, 16 * _LANES)  # keep width tiles lane-dense and modest
    row_bytes = tile_w * itemsize
    block_rows = _pick_block_rows(
        B, row_bytes, sub, extra_resident_bytes=2 * tile_w * itemsize
    )
    out2 = _call(x2, b2, block_rows, tile_w, out_dtype)
    return out2[:, :C].reshape(orig_shape)


if __name__ == "__main__":
    key = jax.random.PRNGKey(0)
    batch, num_classes = 8, 32

    kx, _ = jax.random.split(key)
    x = jax.random.normal(kx, (batch, num_classes), dtype=jnp.float32)
    # nn.Parameter(torch.zeros(num_classes)) -> zeros init; add a small
    # deterministic perturbation so the bias add is visible in the check.
    bias = jnp.zeros((num_classes,), dtype=jnp.float32) + 0.1 * jnp.arange(
        num_classes, dtype=jnp.float32
    )

    out = bias_model_forward(x, bias)
    jax.block_until_ready(out)

    ref = x + bias[None, :]
    assert out.shape == ref.shape, "shape mismatch vs reference"
    assert out.dtype == ref.dtype, "dtype mismatch vs reference"
    assert jnp.allclose(out, ref, atol=1e-6), "mismatch vs reference"
    print("KERNEL_OK")
</pallas_src>

<mosaic_0001>
module attributes {stable_mosaic.version = 11 : i64} {
  func.func @_bias_add_kernel(%arg0: i32, %arg1: i32, %arg2: memref<2x128xf32, #tpu.memory_space<vmem>>, %arg3: memref<1x128xf32, #tpu.memory_space<vmem>>, %arg4: memref<2x128xf32, #tpu.memory_space<vmem>>) attributes {dimension_semantics = [#tpu.dimension_semantics<parallel>, #tpu.dimension_semantics<parallel>], iteration_bounds = array<i64: 1, 1>, scalar_prefetch = 0 : i64, scratch_operands = 0 : i64, tpu.core_type = #tpu.core_type<tc>, window_params = [{transform_indices = @transform_0, window_bounds = array<i64: 2, 128>}, {transform_indices = @transform_1, window_bounds = array<i64: 1, 128>}, {transform_indices = @transform_2, window_bounds = array<i64: 2, 128>}]} {
    %c0 = arith.constant 0 : index
    %c0_0 = arith.constant 0 : index
    %0 = vector.load %arg2[%c0, %c0_0] : memref<2x128xf32, #tpu.memory_space<vmem>>, vector<2x128xf32>
    %c0_1 = arith.constant 0 : index
    %c0_2 = arith.constant 0 : index
    %1 = vector.load %arg3[%c0_1, %c0_2] : memref<1x128xf32, #tpu.memory_space<vmem>>, vector<1x128xf32>
    %2 = vector.broadcast %1 : vector<1x128xf32> to vector<2x128xf32>
    %3 = arith.addf %0, %2 : vector<2x128xf32>
    %c0_3 = arith.constant 0 : index
    %c0_4 = arith.constant 0 : index
    %4 = vector.load %arg4[%c0_3, %c0_4] : memref<2x128xf32, #tpu.memory_space<vmem>>, vector<2x128xf32>
    tpu.vector_store %arg4[%c0_3, %c0_4], %3 {strides = array<i32>} : memref<2x128xf32, #tpu.memory_space<vmem>>, vector<2x128xf32>,
    return
  }
  func.func @transform_0(%arg0: i32, %arg1: i32) -> (i32, i32) {
    %c0_i32 = arith.constant 0 : i32
    return %arg0, %arg1 : i32, i32
  }
  func.func @transform_1(%arg0: i32, %arg1: i32) -> (i32, i32) {
    %c0_i32 = arith.constant 0 : i32
    %c0_i32_0 = arith.constant 0 : i32
    return %c0_i32, %arg1 : i32, i32
  }
  func.func @transform_2(%arg0: i32, %arg1: i32) -> (i32, i32) {
    %c0_i32 = arith.constant 0 : i32
    return %arg0, %arg1 : i32, i32
  }
}

</mosaic_0001>

<llo_original>
// kernel: tpu_custom_call.1
$region0: #{tpu_custom_call.1}
  #allocation0 [shape = 'u32[]', space=smem, size = 0x4, offset = 0x4, fixed_abs, tag = 'smem constant byte address 0x4 - core index']
  #allocation1 [shape = 'u32[72,128]{1,0:T(1,128)}', space=vmem, size = 0x9000, scoped, tag = 'internal scratch']
  %s0 = inlined_call_operand.hbm [shape: f32[2,128], index: 0, kind: input, shape index: {}]
  %s1 = inlined_call_operand.hbm [shape: f32[1,128], index: 1, kind: input, shape index: {}]
  %s2 = inlined_call_operand.hbm [shape: f32[2,128], index: 2, kind: output, shape index: {}]
  %s3 = sld [smem:[#allocation0]]
  $region26: #{tpu_custom_call.1} parent=0
    _
  %s5 = ssub.s32 1, %s3
  %s6 = scalar_select 0, %s5, %s3
  $region1: #{tpu_custom_call.1} parent=0
    #allocation2 [shape = 'u8[1024]{0}', space=vmem, size = 0x400, scoped, tag = 'input window, operand 0, single buffered']
    #allocation3 [shape = 's32[1]{0}', space=sflag, size = 0x4, scoped, tag = 'scoped memory for tpu_custom_call.1']
    #allocation4 [shape = 's32[1]{0}', space=sflag, size = 0x4, scoped, tag = 'scoped memory for tpu_custom_call.1']
    #allocation5 [shape = 'u8[512]{0}', space=vmem, size = 0x400, scoped, tag = 'input window, operand 1, single buffered']
    #allocation6 [shape = 's32[1]{0}', space=sflag, size = 0x4, scoped, tag = 'scoped memory for tpu_custom_call.1']
    #allocation7 [shape = 'u8[1024]{0}', space=vmem, size = 0x400, scoped, tag = 'output window, operand 0, single buffered']
    %7 = vsyncpa [#allocation3], 0
    %8 = vsyncpa [#allocation6], 0
    %9 = vsyncpa [#allocation4], 0
    // Predicated region
    $region2: #{tpu_custom_call.1} parent=1 // pred_check
      _
    $region3: #{tpu_custom_call.1} parent=1 // pred_check_branch
      %11 = sbr.rel (0) target = $region5
    $region4: #{tpu_custom_call.1} parent=1 // pred_region
      %13 = vsyncadd [#allocation3], 0
      %s15 = sshll.u32 %s0, 4
      %s16 = int_to_ptr.hbm [resolvable:$true] %s15
      %s17 = sshll.u32 [#allocation2], 4
      %s18 = int_to_ptr.vmem [resolvable:$true] %s17
      %20 = dma.hbm_to_vmem [thread:$0]  %s16, 32, %s18, [#allocation3]
    $region5: #{tpu_custom_call.1} parent=1 // pred_fallthru
      _
    // Predicated region
    $region6: #{tpu_custom_call.1} parent=1 // pred_check
      _
    $region7: #{tpu_custom_call.1} parent=1 // pred_check_branch
      %22 = sbr.rel (0) target = $region9
    $region8: #{tpu_custom_call.1} parent=1 // pred_region
      %24 = vsyncadd [#allocation6], 0
      %s26 = sshll.u32 %s1, 4
      %s27 = int_to_ptr.hbm [resolvable:$true] %s26
      %s28 = sshll.u32 [#allocation5], 4
      %s29 = int_to_ptr.vmem [resolvable:$true] %s28
      %31 = dma.hbm_to_vmem [thread:$0]  %s27, 16, %s29, [#allocation6]
    $region9: #{tpu_custom_call.1} parent=1 // pred_fallthru
      _
    // Predicated region
    $region10: #{tpu_custom_call.1} parent=1 // pred_check
      _
    $region11: #{tpu_custom_call.1} parent=1 // pred_check_branch
      %33 = sbr.rel (0) target = $region13
    $region12: #{tpu_custom_call.1} parent=1 // pred_region
      %35 = dma.done [#allocation3], 32
    $region13: #{tpu_custom_call.1} parent=1 // pred_fallthru
      _
    // Predicated region
    $region14: #{tpu_custom_call.1} parent=1 // pred_check
      _
    $region15: #{tpu_custom_call.1} parent=1 // pred_check_branch
      %37 = sbr.rel (0) target = $region17
    $region16: #{tpu_custom_call.1} parent=1 // pred_region
      %39 = dma.done [#allocation6], 16
    $region17: #{tpu_custom_call.1} parent=1 // pred_fallthru
      _
    %v40 = vld [vmem:[#allocation2] sm:$0x3]
    %v41 = vld [vmem:[#allocation5] sm:$0x1]
    %v43 = vperm.slane %v41, 0
    %v45 = vadd.f32 %v40, %v43
    %46 = vst [vmem:[#allocation7] sm:$0x3] %v45
    // Predicated region
    $region18: #{tpu_custom_call.1} parent=1 // pred_check
      _
    $region19: #{tpu_custom_call.1} parent=1 // pred_check_branch
      %48 = sbr.rel (0) target = $region21
    $region20: #{tpu_custom_call.1} parent=1 // pred_region
      %50 = vsyncadd [#allocation4], 0
      %s52 = sshll.u32 [#allocation7], 4
      %s53 = int_to_ptr.vmem [resolvable:$true] %s52
      %s54 = sshll.u32 %s2, 4
      %s55 = int_to_ptr.hbm [resolvable:$true] %s54
      %57 = dma.vmem_to_hbm [thread:$0]  %s53, 32, %s55, [#allocation4]
    $region21: #{tpu_custom_call.1} parent=1 // pred_fallthru
      _
    // Predicated region
    $region22: #{tpu_custom_call.1} parent=1 // pred_check
      _
    $region23: #{tpu_custom_call.1} parent=1 // pred_check_branch
      %59 = sbr.rel (0) target = $region25
    $region24: #{tpu_custom_call.1} parent=1 // pred_region
      %61 = dma.done [#allocation4], 32
    $region25: #{tpu_custom_call.1} parent=1 // pred_fallthru
      _
    %62 = vsyncpa [#allocation3], 1
    %63 = vsyncpa [#allocation6], 1
    %64 = vsyncpa [#allocation4], 1

</llo_original>
